<compile_context>
chip_gen: v6e
topology: v6e:2x2x1
jax: 0.10.0
libtpu: 0.0.40
codegen_flags: <defaults>
</compile_context>

<pallas_src>
import jax
import jax.numpy as jnp
from jax.experimental import pallas as pl
from jax.experimental.pallas import tpu as pltpu


def mf_kernel(uids_ref, iids_ref,     # VMEM (1, TB) int32 id tiles
              uaug_ref, iaug_ref,     # VMEM (D+2, NU) / (D+2, NI) augmented tables
              out_ref):               # VMEM (1, TB) float32 score tile
    nu = uaug_ref.shape[1]
    ni = iaug_ref.shape[1]
    tb = out_ref.shape[1]

    uids = uids_ref[...]              # (1, TB)
    iids = iids_ref[...]              # (1, TB)

    # One-hot selection matrices (rows = table row index, lanes = batch slot).
    oh_u = (jax.lax.broadcasted_iota(jnp.int32, (nu, tb), 0) == uids).astype(jnp.float32)
    oh_i = (jax.lax.broadcasted_iota(jnp.int32, (ni, tb), 0) == iids).astype(jnp.float32)

    # Row gather via MXU: (D+2, N) @ (N, TB) -> (D+2, TB), tile already in
    # (feature, batch) layout so the reduction below lands lane-dense.
    u_tile = jnp.dot(uaug_ref[...], oh_u, preferred_element_type=jnp.float32)
    i_tile = jnp.dot(iaug_ref[...], oh_i, preferred_element_type=jnp.float32)

    # Rows 0..D-1: embedding dot product; row D: user_bias * 1; row D+1: 1 * item_bias.
    out_ref[...] = jnp.sum(u_tile * i_tile, axis=0, keepdims=True).astype(out_ref.dtype)


def net_forward(user_ids, item_ids, user_emb, item_emb, user_bias, item_bias):
    """Pallas equivalent of Net.forward -> shape (B,) float32 scores."""
    B = user_ids.shape[0]
    NU, D = user_emb.shape
    NI = item_emb.shape[0]

    # Lane-dense tile width: multiple of 128, capped at 512.
    TB = min(512, int(pl.next_power_of_2(max(B, 128))))
    num_tiles = pl.cdiv(B, TB)
    B_pad = num_tiles * TB

    f32 = jnp.float32

    # Ids on the lane axis, padded with (valid) index 0; padding is sliced off.
    uids = jnp.zeros((1, B_pad), jnp.int32).at[0, :B].set(user_ids.astype(jnp.int32))
    iids = jnp.zeros((1, B_pad), jnp.int32).at[0, :B].set(item_ids.astype(jnp.int32))

    # Augmented transposed tables: biases folded in as two extra feature rows.
    u_aug = jnp.concatenate(
        [user_emb.T.astype(f32),
         user_bias.reshape(1, NU).astype(f32),
         jnp.ones((1, NU), f32)], axis=0)                       # (D+2, NU)
    i_aug = jnp.concatenate(
        [item_emb.T.astype(f32),
         jnp.ones((1, NI), f32),
         item_bias.reshape(1, NI).astype(f32)], axis=0)         # (D+2, NI)

    grid_spec = pltpu.PrefetchScalarGridSpec(
        num_scalar_prefetch=0,
        grid=(num_tiles,),
        in_specs=[
            pl.BlockSpec((1, TB), lambda t: (0, t)),            # user id tile
            pl.BlockSpec((1, TB), lambda t: (0, t)),            # item id tile
            pl.BlockSpec((D + 2, NU), lambda t: (0, 0)),        # full user table (VMEM-resident)
            pl.BlockSpec((D + 2, NI), lambda t: (0, 0)),        # full item table (VMEM-resident)
        ],
        out_specs=pl.BlockSpec((1, TB), lambda t: (0, t)),      # lane-dense score tile
    )

    out = pl.pallas_call(
        mf_kernel,
        out_shape=jax.ShapeDtypeStruct((1, B_pad), f32),
        grid_spec=grid_spec,
        compiler_params=pltpu.CompilerParams(
            dimension_semantics=("parallel",)),                 # each step owns its output block
    )(uids, iids, u_aug, i_aug)

    return out[0, :B]


if __name__ == "__main__":
    num_users, num_items, D, B = 16, 24, 32, 8

    key = jax.random.PRNGKey(0)
    k_u, k_i, k_ub, k_ib, k_uid, k_iid = jax.random.split(key, 6)

    # ScaledEmbedding: normal(0, 1) / embedding_dim
    user_emb = jax.random.normal(k_u, (num_users, D), dtype=jnp.float32) / D
    item_emb = jax.random.normal(k_i, (num_items, D), dtype=jnp.float32) / D
    # ZeroEmbedding initializes biases to zero; use small random values here so
    # the bias path of the kernel is actually exercised by the check.
    user_bias = 0.01 * jax.random.normal(k_ub, (num_users,), dtype=jnp.float32)
    item_bias = 0.01 * jax.random.normal(k_ib, (num_items,), dtype=jnp.float32)

    user_ids = jax.random.randint(k_uid, (B,), 0, num_users, dtype=jnp.int32)
    item_ids = jax.random.randint(k_iid, (B,), 0, num_items, dtype=jnp.int32)

    out = net_forward(user_ids, item_ids, user_emb, item_emb, user_bias, item_bias)
    out = jax.block_until_ready(out)

    # pure-JAX reference
    ref = (jnp.sum(user_emb[user_ids] * item_emb[item_ids], axis=1)
           + user_bias[user_ids] + item_bias[item_ids])

    assert out.shape == (B,), out.shape
    assert jnp.allclose(out, ref, atol=1e-5, rtol=1e-5), (out, ref)
    print("KERNEL_OK")
</pallas_src>

<mosaic_0001>
module attributes {stable_mosaic.version = 11 : i64} {
  func.func @mf_kernel(%arg0: i32, %arg1: memref<1x128xi32, #tpu.memory_space<vmem>>, %arg2: memref<1x128xi32, #tpu.memory_space<vmem>>, %arg3: memref<34x16xf32, #tpu.memory_space<vmem>>, %arg4: memref<34x24xf32, #tpu.memory_space<vmem>>, %arg5: memref<1x128xf32, #tpu.memory_space<vmem>>) attributes {dimension_semantics = [#tpu.dimension_semantics<parallel>], iteration_bounds = array<i64: 1>, scalar_prefetch = 0 : i64, scratch_operands = 0 : i64, tpu.core_type = #tpu.core_type<tc>, window_params = [{transform_indices = @transform_0, window_bounds = array<i64: 1, 128>}, {transform_indices = @transform_1, window_bounds = array<i64: 1, 128>}, {pipeline_mode = #tpu.pipeline_mode<synchronous>, transform_indices = @transform_2, window_bounds = array<i64: 34, 16>}, {pipeline_mode = #tpu.pipeline_mode<synchronous>, transform_indices = @transform_3, window_bounds = array<i64: 34, 24>}, {transform_indices = @transform_4, window_bounds = array<i64: 1, 128>}]} {
    %c0 = arith.constant 0 : index
    %c0_0 = arith.constant 0 : index
    %0 = vector.load %arg1[%c0, %c0_0] : memref<1x128xi32, #tpu.memory_space<vmem>>, vector<1x128xi32>
    %c0_1 = arith.constant 0 : index
    %c0_2 = arith.constant 0 : index
    %1 = vector.load %arg2[%c0_1, %c0_2] : memref<1x128xi32, #tpu.memory_space<vmem>>, vector<1x128xi32>
    %2 = tpu.iota {dimensions = array<i32: 0>} : vector<16x128xi32>
    %3 = vector.broadcast %0 : vector<1x128xi32> to vector<16x128xi32>
    %4 = arith.cmpi eq, %2, %3 : vector<16x128xi32>
    %5 = arith.extui %4 : vector<16x128xi1> to vector<16x128xi32>
    %6 = arith.sitofp %5 : vector<16x128xi32> to vector<16x128xf32>
    %7 = tpu.iota {dimensions = array<i32: 0>} : vector<24x128xi32>
    %8 = vector.broadcast %1 : vector<1x128xi32> to vector<24x128xi32>
    %9 = arith.cmpi eq, %7, %8 : vector<24x128xi32>
    %10 = arith.extui %9 : vector<24x128xi1> to vector<24x128xi32>
    %11 = arith.sitofp %10 : vector<24x128xi32> to vector<24x128xf32>
    %c0_3 = arith.constant 0 : index
    %c0_4 = arith.constant 0 : index
    %12 = vector.load %arg3[%c0_3, %c0_4] : memref<34x16xf32, #tpu.memory_space<vmem>>, vector<34x16xf32>
    %cst = arith.constant dense<0.000000e+00> : vector<34x128xf32>
    %13 = tpu.matmul %12, %6, %cst {dimension_numbers = #tpu.dot_dimension_numbers<[1], [0], [0], [1], [0, 0, 1, 1], [], []>} : vector<34x16xf32>, vector<16x128xf32>, vector<34x128xf32> -> vector<34x128xf32>
    %c0_5 = arith.constant 0 : index
    %c0_6 = arith.constant 0 : index
    %14 = vector.load %arg4[%c0_5, %c0_6] : memref<34x24xf32, #tpu.memory_space<vmem>>, vector<34x24xf32>
    %cst_7 = arith.constant dense<0.000000e+00> : vector<34x128xf32>
    %15 = tpu.matmul %14, %11, %cst_7 {dimension_numbers = #tpu.dot_dimension_numbers<[1], [0], [0], [1], [0, 0, 1, 1], [], []>} : vector<34x24xf32>, vector<24x128xf32>, vector<34x128xf32> -> vector<34x128xf32>
    %16 = arith.mulf %13, %15 : vector<34x128xf32>
    %cst_8 = arith.constant dense<0.000000e+00> : vector<128xf32>
    %17 = vector.multi_reduction <add>, %16, %cst_8 [0] : vector<34x128xf32> to vector<128xf32>
    %18 = vector.shape_cast %17 : vector<128xf32> to vector<1x128xf32>
    %c0_9 = arith.constant 0 : index
    %c0_10 = arith.constant 0 : index
    %19 = vector.load %arg5[%c0_9, %c0_10] : memref<1x128xf32, #tpu.memory_space<vmem>>, vector<1x128xf32>
    tpu.vector_store %arg5[%c0_9, %c0_10], %18 {strides = array<i32>} : memref<1x128xf32, #tpu.memory_space<vmem>>, vector<1x128xf32>,
    return
  }
  func.func @transform_0(%arg0: i32) -> (i32, i32) {
    %c0_i32 = arith.constant 0 : i32
    %c0_i32_0 = arith.constant 0 : i32
    return %c0_i32, %arg0 : i32, i32
  }
  func.func @transform_1(%arg0: i32) -> (i32, i32) {
    %c0_i32 = arith.constant 0 : i32
    %c0_i32_0 = arith.constant 0 : i32
    return %c0_i32, %arg0 : i32, i32
  }
  func.func @transform_2(%arg0: i32) -> (i32, i32) {
    %c0_i32 = arith.constant 0 : i32
    %c0_i32_0 = arith.constant 0 : i32
    %c0_i32_1 = arith.constant 0 : i32
    return %c0_i32, %c0_i32_0 : i32, i32
  }
  func.func @transform_3(%arg0: i32) -> (i32, i32) {
    %c0_i32 = arith.constant 0 : i32
    %c0_i32_0 = arith.constant 0 : i32
    %c0_i32_1 = arith.constant 0 : i32
    return %c0_i32, %c0_i32_0 : i32, i32
  }
  func.func @transform_4(%arg0: i32) -> (i32, i32) {
    %c0_i32 = arith.constant 0 : i32
    %c0_i32_0 = arith.constant 0 : i32
    return %c0_i32, %arg0 : i32, i32
  }
}

</mosaic_0001>

<llo_original>
// kernel: tpu_custom_call.1
$region0: #{tpu_custom_call.1}
  #allocation0 [shape = 'u32[]', space=smem, size = 0x4, offset = 0x4, fixed_abs, tag = 'smem constant byte address 0x4 - core index']
  #allocation1 [shape = 'u32[144,128]{1,0:T(1,128)}', space=vmem, size = 0x12000, scoped, tag = 'internal scratch']
  %s0 = inlined_call_operand.vmem [shape: s32[1,128], index: 0, kind: input, shape index: {}]
  %s1 = inlined_call_operand.vmem [shape: s32[1,128], index: 1, kind: input, shape index: {}]
  %s2 = inlined_call_operand.vmem [shape: f32[34,16], index: 2, kind: input, shape index: {}]
  %s3 = inlined_call_operand.vmem [shape: f32[34,24], index: 3, kind: input, shape index: {}]
  %s4 = inlined_call_operand.hbm [shape: f32[1,128], index: 4, kind: output, shape index: {}]
  %s5 = sld [smem:[#allocation0]]
  $region26: #{tpu_custom_call.1} parent=0
    _
  %s7 = ssub.s32 1, %s5
  %s8 = scalar_select 0, %s7, %s5
  $region1: #{tpu_custom_call.1} parent=0
    #allocation2 [shape = 'u8[512]{0}', space=vmem, size = 0x400, scoped, tag = 'output window, operand 0, single buffered']
    #allocation3 [shape = 's32[1]{0}', space=sflag, size = 0x4, scoped, tag = 'scoped memory for tpu_custom_call.1']
    %9 = vsyncpa [#allocation3], 0
    // Predicated region
    $region2: #{tpu_custom_call.1} parent=1 // pred_check
      _
    $region3: #{tpu_custom_call.1} parent=1 // pred_check_branch
      %11 = sbr.rel (0) target = $region5
    $region4: #{tpu_custom_call.1} parent=1 // pred_region
      _
    $region5: #{tpu_custom_call.1} parent=1 // pred_fallthru
      _
    // Predicated region
    $region6: #{tpu_custom_call.1} parent=1 // pred_check
      _
    $region7: #{tpu_custom_call.1} parent=1 // pred_check_branch
      %13 = sbr.rel (0) target = $region9
    $region8: #{tpu_custom_call.1} parent=1 // pred_region
      _
    $region9: #{tpu_custom_call.1} parent=1 // pred_fallthru
      _
    // Predicated region
    $region10: #{tpu_custom_call.1} parent=1 // pred_check
      _
    $region11: #{tpu_custom_call.1} parent=1 // pred_check_branch
      %15 = sbr.rel (0) target = $region13
    $region12: #{tpu_custom_call.1} parent=1 // pred_region
      _
    $region13: #{tpu_custom_call.1} parent=1 // pred_fallthru
      _
    // Predicated region
    $region14: #{tpu_custom_call.1} parent=1 // pred_check
      _
    $region15: #{tpu_custom_call.1} parent=1 // pred_check_branch
      %17 = sbr.rel (0) target = $region17
    $region16: #{tpu_custom_call.1} parent=1 // pred_region
      _
    $region17: #{tpu_custom_call.1} parent=1 // pred_fallthru
      _
    %v18 = vld [vmem:[%s0] sm:$0x1]
    %v19 = vld [vmem:[%s1] sm:$0x1]
    %v20 = vlaneseq
    %v21 = vshrl.u32 %v20, 7
    %v22 = vadd.s32 %v21, 8
    %v23 = vlaneseq
    %v24 = vshrl.u32 %v23, 7
    %v25 = vsub.s32 0, %v24
    %v26 = vrot.slane %v18, %v25
    %vm27 = vcmp.eq.s32.totalorder %v21, %v26
    %vm28 = vcmp.eq.s32.totalorder %v22, %v26
    %v29 = vsel %vm27, 1, 0
    %v30 = vsel %vm28, 1, 0
    %v31 = vcvt.s32.f32 %v29
    %v32 = vcvt.s32.f32 %v30
    %v33 = vadd.s32 %v21, 16
    %v34 = vlaneseq
    %v35 = vshrl.u32 %v34, 7
    %v36 = vsub.s32 0, %v35
    %v37 = vrot.slane %v19, %v36
    %vm38 = vcmp.eq.s32.totalorder %v21, %v37
    %vm39 = vcmp.eq.s32.totalorder %v22, %v37
    %vm40 = vcmp.eq.s32.totalorder %v33, %v37
    %v41 = vsel %vm38, 1, 0
    %v42 = vsel %vm39, 1, 0
    %v43 = vsel %vm40, 1, 0
    %v44 = vcvt.s32.f32 %v41
    %v45 = vcvt.s32.f32 %v42
    %v46 = vcvt.s32.f32 %v43
    %v47 = vld [vmem:[%s2] sm:$0xff]
    %v48 = vld [vmem:[%s2 + $0x8] sm:$0xff]
    %v49 = vld [vmem:[%s2 + $0x10] sm:$0xff]
    %v50 = vld [vmem:[%s2 + $0x18] sm:$0xff]
    %v51 = vld [vmem:[%s2 + $0x20] sm:$0x3]
    %vm52 = vcmask 130048
    %v54 = vsel %vm52, %v47, 0
    %v57 = vsel %vm52, %v48, 0
    %v60 = vsel %vm52, %v49, 0
    %v63 = vsel %vm52, %v50, 0
    %v66 = vsel %vm52, %v51, 0
    %68 = vmatprep.subr.mxu0 0.0
    %69 = vmatpush1.msra.mxu0 0.0
    %70 = vmatprep.subr.mxu0 0.0
    %71 = vmatpush1.msra.mxu0 0.0
    %72 = vmatprep.subr.mxu0 0.0
    %73 = vmatpush1.msra.mxu0 0.0
    %74 = vmatprep.subr.mxu0 0.0
    %75 = vmatpush1.msra.mxu0 0.0
    %76 = vmatprep.subr.mxu0 0.0
    %77 = vmatpush1.msra.mxu0 0.0
    %78 = vmatprep.subr.mxu0 0.0
    %79 = vmatpush1.msra.mxu0 0.0
    %80 = vmatprep.subr.mxu0 0.0
    %81 = vmatpush1.msra.mxu0 0.0
    %82 = vmatprep.subr.mxu0 0.0
    %83 = vmatpush1.msra.mxu0 0.0
    %84 = vmatprep.subr.mxu0 0.0
    %85 = vmatpush1.msra.mxu0 0.0
    %86 = vmatprep.subr.mxu0 0.0
    %87 = vmatpush1.msra.mxu0 0.0
    %88 = vmatprep.subr.mxu0 0.0
    %89 = vmatpush1.msra.mxu0 0.0
    %90 = vmatprep.subr.mxu0 0.0
    %91 = vmatpush1.msra.mxu0 0.0
    %92 = vmatprep.subr.mxu0 0.0
    %93 = vmatpush1.msra.mxu0 0.0
    %94 = vmatprep.subr.mxu0 0.0
    %95 = vmatpush1.msra.mxu0 0.0
    %96 = vmatprep.subr.mxu0 0.0
    %97 = vmatpush1.msra.mxu0 %v32
    %98 = vmatprep.subr.mxu0 0.0
    %99 = vmatpush1.msra.mxu0 %v31
    %100 = vmatprep.subr.mxu0 0.0
    %101 = vmatpush2.msra.mxu0 0.0
    %102 = vmatprep.subr.mxu0 0.0
    %103 = vmatpush2.msra.mxu0 0.0
    %104 = vmatprep.subr.mxu0 0.0
    %105 = vmatpush2.msra.mxu0 0.0
    %106 = vmatprep.subr.mxu0 0.0
    %107 = vmatpush2.msra.mxu0 0.0
    %108 = vmatprep.subr.mxu0 0.0
    %109 = vmatpush2.msra.mxu0 0.0
    %110 = vmatprep.subr.mxu0 0.0
    %111 = vmatpush2.msra.mxu0 0.0
    %112 = vmatprep.subr.mxu0 0.0
    %113 = vmatpush2.msra.mxu0 0.0
    %114 = vmatprep.subr.mxu0 0.0
    %115 = vmatpush2.msra.mxu0 0.0
    %116 = vmatprep.subr.mxu0 0.0
    %117 = vmatpush2.msra.mxu0 0.0
    %118 = vmatprep.subr.mxu0 0.0
    %119 = vmatpush2.msra.mxu0 0.0
    %120 = vmatprep.subr.mxu0 0.0
    %121 = vmatpush2.msra.mxu0 0.0
    %122 = vmatprep.subr.mxu0 0.0
    %123 = vmatpush2.msra.mxu0 0.0
    %124 = vmatprep.subr.mxu0 0.0
    %125 = vmatpush2.msra.mxu0 0.0
    %126 = vmatprep.subr.mxu0 0.0
    %127 = vmatpush2.msra.mxu0 0.0
    %128 = vmatprep.subr.mxu0 0.0
    %129 = vmatpush2.msra.mxu0 0.0
    %130 = vmatprep.subr.mxu0 0.0
    %131 = vmatpush2.msra.mxu0 0.0
    %132 = vmatprep.mubr.f32.mxu0 0.0
    %133 = vmatmul.mubr.f32.gmra.mxu0 %v54
    %v134 = vpop.f32.mrf.mxu0
    %v135 = vadd.f32 0.0, %v134
    %v136 = vpop.f32.mrf.mxu0
    %137 = vmatprep.mubr.f32.mxu0 0.0
    %138 = vmatmul.mubr.f32.gmra.mxu0 %v57
    %v139 = vpop.f32.mrf.mxu0
    %v140 = vadd.f32 0.0, %v139
    %v141 = vpop.f32.mrf.mxu0
    %142 = vmatprep.mubr.f32.mxu0 0.0
    %143 = vmatmul.mubr.f32.gmra.mxu0 %v60
    %v144 = vpop.f32.mrf.mxu0
    %v145 = vadd.f32 0.0, %v144
    %v146 = vpop.f32.mrf.mxu0
    %147 = vmatprep.mubr.f32.mxu0 0.0
    %148 = vmatmul.mubr.f32.gmra.mxu0 %v63
    %v149 = vpop.f32.mrf.mxu0
    %v150 = vadd.f32 0.0, %v149
    %v151 = vpop.f32.mrf.mxu0
    %152 = vmatprep.mubr.f32.mxu0 0.0
    %153 = vmatmul.mubr.f32.gmra.mxu0 %v66
    %v154 = vpop.f32.mrf.mxu0
    %v155 = vadd.f32 0.0, %v154
    %v156 = vpop.f32.mrf.mxu0
    %157 = vdwg.mxu0
    %v158 = vld [vmem:[%s3] sm:$0xff]
    %v159 = vld [vmem:[%s3 + $0x8] sm:$0xff]
    %v160 = vld [vmem:[%s3 + $0x10] sm:$0xff]
    %v161 = vld [vmem:[%s3 + $0x18] sm:$0xff]
    %v162 = vld [vmem:[%s3 + $0x20] sm:$0x3]
    %vm163 = vcmask 195584
    %v165 = vsel %vm163, %v158, 0
    %v168 = vsel %vm163, %v159, 0
    %v171 = vsel %vm163, %v160, 0
    %v174 = vsel %vm163, %v161, 0
    %v177 = vsel %vm163, %v162, 0
    %179 = vmatprep.subr.mxu0 0.0
    %180 = vmatpush1.msra.mxu0 0.0
    %181 = vmatprep.subr.mxu0 0.0
    %182 = vmatpush1.msra.mxu0 0.0
    %183 = vmatprep.subr.mxu0 0.0
    %184 = vmatpush1.msra.mxu0 0.0
    %185 = vmatprep.subr.mxu0 0.0
    %186 = vmatpush1.msra.mxu0 0.0
    %187 = vmatprep.subr.mxu0 0.0
    %188 = vmatpush1.msra.mxu0 0.0
    %189 = vmatprep.subr.mxu0 0.0
    %190 = vmatpush1.msra.mxu0 0.0
    %191 = vmatprep.subr.mxu0 0.0
    %192 = vmatpush1.msra.mxu0 0.0
    %193 = vmatprep.subr.mxu0 0.0
    %194 = vmatpush1.msra.mxu0 0.0
    %195 = vmatprep.subr.mxu0 0.0
    %196 = vmatpush1.msra.mxu0 0.0
    %197 = vmatprep.subr.mxu0 0.0
    %198 = vmatpush1.msra.mxu0 0.0
    %199 = vmatprep.subr.mxu0 0.0
    %200 = vmatpush1.msra.mxu0 0.0
    %201 = vmatprep.subr.mxu0 0.0
    %202 = vmatpush1.msra.mxu0 0.0
    %203 = vmatprep.subr.mxu0 0.0
    %204 = vmatpush1.msra.mxu0 0.0
    %205 = vmatprep.subr.mxu0 0.0
    %206 = vmatpush1.msra.mxu0 %v46
    %207 = vmatprep.subr.mxu0 0.0
    %208 = vmatpush1.msra.mxu0 %v45
    %209 = vmatprep.subr.mxu0 0.0
    %210 = vmatpush1.msra.mxu0 %v44
    %211 = vmatprep.subr.mxu0 0.0
    %212 = vmatpush2.msra.mxu0 0.0
    %213 = vmatprep.subr.mxu0 0.0
    %214 = vmatpush2.msra.mxu0 0.0
    %215 = vmatprep.subr.mxu0 0.0
    %216 = vmatpush2.msra.mxu0 0.0
    %217 = vmatprep.subr.mxu0 0.0
    %218 = vmatpush2.msra.mxu0 0.0
    %219 = vmatprep.subr.mxu0 0.0
    %220 = vmatpush2.msra.mxu0 0.0
    %221 = vmatprep.subr.mxu0 0.0
    %222 = vmatpush2.msra.mxu0 0.0
    %223 = vmatprep.subr.mxu0 0.0
    %224 = vmatpush2.msra.mxu0 0.0
    %225 = vmatprep.subr.mxu0 0.0
    %226 = vmatpush2.msra.mxu0 0.0
    %227 = vmatprep.subr.mxu0 0.0
    %228 = vmatpush2.msra.mxu0 0.0
    %229 = vmatprep.subr.mxu0 0.0
    %230 = vmatpush2.msra.mxu0 0.0
    %231 = vmatprep.subr.mxu0 0.0
    %232 = vmatpush2.msra.mxu0 0.0
    %233 = vmatprep.subr.mxu0 0.0
    %234 = vmatpush2.msra.mxu0 0.0
    %235 = vmatprep.subr.mxu0 0.0
    %236 = vmatpush2.msra.mxu0 0.0
    %237 = vmatprep.subr.mxu0 0.0
    %238 = vmatpush2.msra.mxu0 0.0
    %239 = vmatprep.subr.mxu0 0.0
    %240 = vmatpush2.msra.mxu0 0.0
    %241 = vmatprep.subr.mxu0 0.0
    %242 = vmatpush2.msra.mxu0 0.0
    %243 = vmatprep.mubr.f32.mxu0 0.0
    %244 = vmatmul.mubr.f32.gmra.mxu0 %v165
    %v245 = vpop.f32.mrf.mxu0
    %v246 = vadd.f32 0.0, %v245
    %v247 = vpop.f32.mrf.mxu0
    %248 = vmatprep.mubr.f32.mxu0 0.0
    %249 = vmatmul.mubr.f32.gmra.mxu0 %v168
    %v250 = vpop.f32.mrf.mxu0
    %v251 = vadd.f32 0.0, %v250
    %v252 = vpop.f32.mrf.mxu0
    %253 = vmatprep.mubr.f32.mxu0 0.0
    %254 = vmatmul.mubr.f32.gmra.mxu0 %v171
    %v255 = vpop.f32.mrf.mxu0
    %v256 = vadd.f32 0.0, %v255
    %v257 = vpop.f32.mrf.mxu0
    %258 = vmatprep.mubr.f32.mxu0 0.0
    %259 = vmatmul.mubr.f32.gmra.mxu0 %v174
    %v260 = vpop.f32.mrf.mxu0
    %v261 = vadd.f32 0.0, %v260
    %v262 = vpop.f32.mrf.mxu0
    %263 = vmatprep.mubr.f32.mxu0 0.0
    %264 = vmatmul.mubr.f32.gmra.mxu0 %v177
    %v265 = vpop.f32.mrf.mxu0
    %v266 = vadd.f32 0.0, %v265
    %v267 = vpop.f32.mrf.mxu0
    %268 = vdwg.mxu0
    %v269 = vmul.f32 %v135, %v246
    %v270 = vmul.f32 %v140, %v251
    %v271 = vmul.f32 %v145, %v256
    %v272 = vmul.f32 %v150, %v261
    %v273 = vmul.f32 %v155, %v266
    %v274 = vadd.f32 %v269, %v270
    %v275 = vadd.f32 %v274, %v271
    %v276 = vadd.f32 %v275, %v272
    %vm277 = vcmask 1041408
    %v278 = vsel %vm277, %v273, 0.0
    %v279 = vadd.f32 %v276, %v278
    %v280 = vrot.slane %v279, 4
    %v281 = vadd.f32 %v279, %v280
    %v282 = vrot.slane %v281, 2
    %v283 = vadd.f32 %v281, %v282
    %v284 = vrot.slane %v283, 1
    %v285 = vadd.f32 %v283, %v284
    %286 = vst [vmem:[#allocation2] sm:$0x1] %v285
    // Predicated region
    $region18: #{tpu_custom_call.1} parent=1 // pred_check
      _
    $region19: #{tpu_custom_call.1} parent=1 // pred_check_branch
      %288 = sbr.rel (0) target = $region21
    $region20: #{tpu_custom_call.1} parent=1 // pred_region
      %s290 = ssub.s32 16, 16
      %291 = vsyncadd [#allocation3], %s290
      %s293 = sshll.u32 [#allocation2], 4
      %s294 = int_to_ptr.vmem [resolvable:$true] %s293
      %296 = dma.vmem_to_hbm [thread:$0]  %s294, 16, %s4, [#allocation3]
    $region21: #{tpu_custom_call.1} parent=1 // pred_fallthru
      _
    // Predicated region
    $region22: #{tpu_custom_call.1} parent=1 // pred_check
      _
    $region23: #{tpu_custom_call.1} parent=1 // pred_check_branch
      %298 = sbr.rel (0) target = $region25
    $region24: #{tpu_custom_call.1} parent=1 // pred_region
      %299 = dma.done [#allocation3], 16
    $region25: #{tpu_custom_call.1} parent=1 // pred_fallthru
      _
    %300 = vsyncpa [#allocation3], 1

</llo_original>
